<compile_context>
chip_gen: v6e
topology: v6e:2x2x1
jax: 0.10.0
libtpu: 0.0.40
codegen_flags: <defaults>
</compile_context>

<pallas_src>
import math

import jax
import jax.numpy as jnp
from jax.experimental import pallas as pl
from jax.experimental.pallas import tpu as pltpu


def _round_up(x, m):
    return ((x + m - 1) // m) * m


def _linear_kernel(x_ref, w_ref, b_ref, o_ref):
    # x_ref: (tm, tk) bf16   — activation tile
    # w_ref: (tk, tn) bf16   — weight tile, already (F, C) layout
    # b_ref: (1, tn)  f32    — bias tile
    # o_ref: (tm, tn) f32    — output tile; resident across the K axis, so it
    #                          doubles as the accumulator.
    k = pl.program_id(2)

    @pl.when(k == 0)
    def _():
        o_ref[...] = jnp.broadcast_to(b_ref[...], o_ref.shape)

    o_ref[...] += jnp.dot(x_ref[...], w_ref[...],
                          preferred_element_type=jnp.float32)


def logistic_regression_forward(x, weight, bias, *, tm=512, tn=256, tk=1024):
    """z = x @ weight.T + bias  (same semantics as torch nn.Linear).

    Inputs are cast to bf16 for the MXU; accumulation and output are f32.
    """
    B, F = x.shape
    C, F2 = weight.shape
    assert F == F2
    assert bias.shape == (C,)

    F128 = _round_up(F, 128)
    C128 = _round_up(C, 128)
    tm = min(tm, _round_up(B, 8))

    # Keep the whole bf16 weight VMEM-resident when it is small (the usual
    # logistic-regression regime): single (Fp, Cp) block with a constant block
    # index -> fetched from HBM exactly once.  Otherwise tile K and N.
    if F128 * C128 * 2 <= (4 << 20):
        tk, tn = F128, C128
    else:
        tk, tn = min(tk, F128), min(tn, C128)

    # Shrink the batch tile until double-buffered tiles fit a conservative
    # per-core VMEM budget (OK on v5e 16 MiB scoped default, v7x 64 MiB/TC).
    def _tile_bytes(tm_):
        return (2 * tm_ * tk * 2      # x tiles (bf16, double-buffered)
                + 2 * tk * tn * 2     # weight tiles (bf16)
                + 2 * tm_ * tn * 4    # output/accumulator tiles (f32)
                + 2 * tn * 4)         # bias
    budget = 20 << 20
    while tm > 8 and _tile_bytes(tm) > budget:
        tm = max(8, _round_up(tm // 2, 8))

    Fp = _round_up(F, tk)
    Cp = _round_up(C, tn)

    # bf16 operands; one-time XLA transpose of the weight to (F, C).
    xb = x.astype(jnp.bfloat16)
    if Fp != F:
        xb = jnp.pad(xb, ((0, 0), (0, Fp - F)))          # zero-pad reduction dim
    wt = weight.astype(jnp.bfloat16).T                    # (F, C)
    if Fp != F or Cp != C:
        wt = jnp.pad(wt, ((0, Fp - F), (0, Cp - C)))
    bp = (bias if Cp == C else jnp.pad(bias, (0, Cp - C))).reshape(1, Cp)
    bp = bp.astype(jnp.float32)

    grid = (pl.cdiv(B, tm), Cp // tn, Fp // tk)

    out = pl.pallas_call(
        _linear_kernel,
        out_shape=jax.ShapeDtypeStruct((B, Cp), jnp.float32),
        grid=grid,
        in_specs=[
            pl.BlockSpec((tm, tk), lambda i, j, k: (i, k)),   # x
            pl.BlockSpec((tk, tn), lambda i, j, k: (k, j)),   # weight (F, C)
            pl.BlockSpec((1, tn), lambda i, j, k: (0, j)),    # bias
        ],
        out_specs=pl.BlockSpec((tm, tn), lambda i, j, k: (i, j)),
        compiler_params=pltpu.CompilerParams(
            dimension_semantics=("parallel", "parallel", "arbitrary"),
            vmem_limit_bytes=min(max(_tile_bytes(tm) + (2 << 20), 16 << 20),
                                 64 << 20)),
    )(xb, wt, bp)

    return out if Cp == C else out[:, :C]


def xavier_uniform(key, shape):
    # Matches torch.nn.init.xavier_uniform_ (gain=1) for a 2-D weight.
    fan_out, fan_in = shape
    bound = math.sqrt(6.0 / (fan_in + fan_out))
    return jax.random.uniform(key, shape, jnp.float32, -bound, bound)


# TODO(synk): reg_loss / Adam training loop are host-side training utilities,
# not part of the forward pass, and are intentionally not implemented here.

if __name__ == "__main__":
    num_features = 32
    num_classes = 16
    batch = 8

    key = jax.random.PRNGKey(0)
    kx, kw, kb = jax.random.split(key, 3)

    x = jax.random.normal(kx, (batch, num_features), jnp.float32)
    weight = xavier_uniform(kw, (num_classes, num_features))
    # nn.Linear default bias init: U(-1/sqrt(fan_in), 1/sqrt(fan_in))
    bb = 1.0 / math.sqrt(num_features)
    bias = jax.random.uniform(kb, (num_classes,), jnp.float32, -bb, bb)

    z = logistic_regression_forward(x, weight, bias)
    jax.block_until_ready(z)

    # Correctness check (bf16 operands, f32 accumulation -> loose-ish tol).
    z_ref = x @ weight.T + bias
    assert z.shape == (batch, num_classes)
    assert jnp.allclose(z, z_ref, atol=2e-2, rtol=2e-2), (
        float(jnp.max(jnp.abs(z - z_ref))))

    print("KERNEL_OK")
</pallas_src>

<mosaic_0001>
module attributes {stable_mosaic.version = 11 : i64} {
  func.func @_linear_kernel(%arg0: i32, %arg1: i32, %arg2: i32, %arg3: memref<8x128xbf16, #tpu.memory_space<vmem>>, %arg4: memref<128x128xbf16, #tpu.memory_space<vmem>>, %arg5: memref<1x128xf32, #tpu.memory_space<vmem>>, %arg6: memref<8x128xf32, #tpu.memory_space<vmem>>) attributes {dimension_semantics = [#tpu.dimension_semantics<parallel>, #tpu.dimension_semantics<parallel>, #tpu.dimension_semantics<arbitrary>], iteration_bounds = array<i64: 1, 1, 1>, scalar_prefetch = 0 : i64, scratch_operands = 0 : i64, tpu.core_type = #tpu.core_type<tc>, window_params = [{transform_indices = @transform_0, window_bounds = array<i64: 8, 128>}, {transform_indices = @transform_1, window_bounds = array<i64: 128, 128>}, {transform_indices = @transform_2, window_bounds = array<i64: 1, 128>}, {transform_indices = @transform_3, window_bounds = array<i64: 8, 128>}]} {
    %c0_i32 = arith.constant 0 : i32
    %0 = arith.cmpi eq, %arg2, %c0_i32 : i32
    %1 = arith.extui %0 : i1 to i32
    %c0_i32_0 = arith.constant 0 : i32
    %2 = arith.cmpi ne, %1, %c0_i32_0 : i32
    scf.if %2 {
      %c0_8 = arith.constant 0 : index
      %c0_9 = arith.constant 0 : index
      %9 = vector.load %arg5[%c0_8, %c0_9] : memref<1x128xf32, #tpu.memory_space<vmem>>, vector<1x128xf32>
      %10 = vector.shape_cast %9 : vector<1x128xf32> to vector<1x128xf32>
      %11 = vector.broadcast %10 : vector<1x128xf32> to vector<8x128xf32>
      %c0_10 = arith.constant 0 : index
      %c0_11 = arith.constant 0 : index
      %12 = vector.load %arg6[%c0_10, %c0_11] : memref<8x128xf32, #tpu.memory_space<vmem>>, vector<8x128xf32>
      tpu.vector_store %arg6[%c0_10, %c0_11], %11 {strides = array<i32>} : memref<8x128xf32, #tpu.memory_space<vmem>>, vector<8x128xf32>,
    } else {
    }
    %c0 = arith.constant 0 : index
    %c0_1 = arith.constant 0 : index
    %3 = vector.load %arg6[%c0, %c0_1] : memref<8x128xf32, #tpu.memory_space<vmem>>, vector<8x128xf32>
    %c0_2 = arith.constant 0 : index
    %c0_3 = arith.constant 0 : index
    %4 = vector.load %arg3[%c0_2, %c0_3] : memref<8x128xbf16, #tpu.memory_space<vmem>>, vector<8x128xbf16>
    %c0_4 = arith.constant 0 : index
    %c0_5 = arith.constant 0 : index
    %5 = vector.load %arg4[%c0_4, %c0_5] : memref<128x128xbf16, #tpu.memory_space<vmem>>, vector<128x128xbf16>
    %cst = arith.constant dense<0.000000e+00> : vector<8x128xf32>
    %6 = tpu.matmul %4, %5, %cst {dimension_numbers = #tpu.dot_dimension_numbers<[1], [0], [0], [1], [0, 0, 1, 1], [], []>} : vector<8x128xbf16>, vector<128x128xbf16>, vector<8x128xf32> -> vector<8x128xf32>
    %7 = arith.addf %3, %6 : vector<8x128xf32>
    %c0_6 = arith.constant 0 : index
    %c0_7 = arith.constant 0 : index
    %8 = vector.load %arg6[%c0_6, %c0_7] : memref<8x128xf32, #tpu.memory_space<vmem>>, vector<8x128xf32>
    tpu.vector_store %arg6[%c0_6, %c0_7], %7 {strides = array<i32>} : memref<8x128xf32, #tpu.memory_space<vmem>>, vector<8x128xf32>,
    return
  }
  func.func @transform_0(%arg0: i32, %arg1: i32, %arg2: i32) -> (i32, i32) {
    %c0_i32 = arith.constant 0 : i32
    return %arg0, %arg2 : i32, i32
  }
  func.func @transform_1(%arg0: i32, %arg1: i32, %arg2: i32) -> (i32, i32) {
    %c0_i32 = arith.constant 0 : i32
    return %arg2, %arg1 : i32, i32
  }
  func.func @transform_2(%arg0: i32, %arg1: i32, %arg2: i32) -> (i32, i32) {
    %c0_i32 = arith.constant 0 : i32
    %c0_i32_0 = arith.constant 0 : i32
    return %c0_i32, %arg1 : i32, i32
  }
  func.func @transform_3(%arg0: i32, %arg1: i32, %arg2: i32) -> (i32, i32) {
    %c0_i32 = arith.constant 0 : i32
    return %arg0, %arg1 : i32, i32
  }
}

</mosaic_0001>

<llo_original>
// kernel: tpu_custom_call.1
$region0: #{tpu_custom_call.1}
  #allocation0 [shape = 'u32[]', space=smem, size = 0x4, offset = 0x4, fixed_abs, tag = 'smem constant byte address 0x4 - core index']
  #allocation1 [shape = 'u32[144,128]{1,0:T(1,128)}', space=vmem, size = 0x12000, scoped, tag = 'internal scratch']
  %s0 = inlined_call_operand.hbm [shape: bf16[8,128], index: 0, kind: input, shape index: {}]
  %s1 = inlined_call_operand.hbm [shape: bf16[128,128], index: 1, kind: input, shape index: {}]
  %s2 = inlined_call_operand.vmem [shape: f32[1,128], index: 2, kind: input, shape index: {}]
  %s3 = inlined_call_operand.hbm [shape: f32[8,128], index: 3, kind: output, shape index: {}]
  %s4 = sld [smem:[#allocation0]]
  $region34: #{tpu_custom_call.1} parent=0
    _
  %s6 = ssub.s32 1, %s4
  %s7 = scalar_select 0, %s6, %s4
  $region1: #{tpu_custom_call.1} parent=0
    #allocation2 [shape = 'u8[2048]{0}', space=vmem, size = 0x800, scoped, tag = 'input window, operand 0, single buffered']
    #allocation3 [shape = 's32[1]{0}', space=sflag, size = 0x4, scoped, tag = 'scoped memory for tpu_custom_call.1']
    #allocation4 [shape = 's32[1]{0}', space=sflag, size = 0x4, scoped, tag = 'scoped memory for tpu_custom_call.1']
    #allocation5 [shape = 'u8[32768]{0}', space=vmem, size = 0x8000, scoped, tag = 'input window, operand 1, single buffered']
    #allocation6 [shape = 's32[1]{0}', space=sflag, size = 0x4, scoped, tag = 'scoped memory for tpu_custom_call.1']
    #allocation7 [shape = 'u8[4096]{0}', space=vmem, size = 0x1000, scoped, tag = 'output window, operand 0, single buffered']
    %8 = vsyncpa [#allocation3], 0
    %9 = vsyncpa [#allocation6], 0
    %10 = vsyncpa [#allocation4], 0
    // Predicated region
    $region2: #{tpu_custom_call.1} parent=1 // pred_check
      _
    $region3: #{tpu_custom_call.1} parent=1 // pred_check_branch
      %12 = sbr.rel (0) target = $region5
    $region4: #{tpu_custom_call.1} parent=1 // pred_region
      %s14 = ssub.s32 64, 64
      %15 = vsyncadd [#allocation3], %s14
      %s17 = sshll.u32 [#allocation2], 4
      %s18 = int_to_ptr.vmem [resolvable:$true] %s17
      %20 = dma.hbm_to_vmem [thread:$0]  %s0, 64, %s18, [#allocation3]
    $region5: #{tpu_custom_call.1} parent=1 // pred_fallthru
      _
    // Predicated region
    $region6: #{tpu_custom_call.1} parent=1 // pred_check
      _
    $region7: #{tpu_custom_call.1} parent=1 // pred_check_branch
      %22 = sbr.rel (0) target = $region9
    $region8: #{tpu_custom_call.1} parent=1 // pred_region
      %s24 = ssub.s32 1024, 1024
      %25 = vsyncadd [#allocation6], %s24
      %s26 = sshll.u32 [#allocation5], 4
      %s27 = int_to_ptr.vmem [resolvable:$true] %s26
      %32 = dma.hbm_to_vmem [thread:$0]  %s1, 1024, %s27, [#allocation6], 64, 64, 4
    $region9: #{tpu_custom_call.1} parent=1 // pred_fallthru
      _
    // Predicated region
    $region10: #{tpu_custom_call.1} parent=1 // pred_check
      _
    $region11: #{tpu_custom_call.1} parent=1 // pred_check_branch
      %34 = sbr.rel (0) target = $region13
    $region12: #{tpu_custom_call.1} parent=1 // pred_region
      _
    $region13: #{tpu_custom_call.1} parent=1 // pred_fallthru
      _
    // Predicated region
    $region14: #{tpu_custom_call.1} parent=1 // pred_check
      _
    $region15: #{tpu_custom_call.1} parent=1 // pred_check_branch
      %36 = sbr.rel (0) target = $region17
    $region16: #{tpu_custom_call.1} parent=1 // pred_region
      %37 = dma.done [#allocation3], 64
    $region17: #{tpu_custom_call.1} parent=1 // pred_fallthru
      _
    // Predicated region
    $region18: #{tpu_custom_call.1} parent=1 // pred_check
      _
    $region19: #{tpu_custom_call.1} parent=1 // pred_check_branch
      %39 = sbr.rel (0) target = $region21
    $region20: #{tpu_custom_call.1} parent=1 // pred_region
      %40 = dma.done [#allocation6], 1024
    $region21: #{tpu_custom_call.1} parent=1 // pred_fallthru
      _
    %p42 = scmp.eq.s32.totalorder 0, 0
    // Predicated region
    $region22: #{tpu_custom_call.1} parent=1 // pred_check
      %p43 = pneg %p42
    $region23: #{tpu_custom_call.1} parent=1 // pred_check_branch
      %45 = sbr.rel (%p43) target = $region25
    $region24: #{tpu_custom_call.1} parent=1 // pred_region
      %v46 = vld [vmem:[%s2] sm:$0x1]
      %v48 = vlaneseq
      %v49 = vshrl.u32 %v48, 7
      %v50 = vsub.s32 0, %v49
      %v51 = vrot.slane %v46, %v50
      %53 = vst [vmem:[#allocation7] sm:$0xff] %v51
    $region25: #{tpu_custom_call.1} parent=1 // pred_fallthru
      _
    %v54 = vld [vmem:[#allocation7] sm:$0xff]
    %v55 = vld [vmem:[#allocation2] sm:$0xf]
    %v56 = vld [vmem:[#allocation5] sm:$0xf]
    %v57 = vld [vmem:[#allocation5 + $0x4] sm:$0xf]
    %v58 = vld [vmem:[#allocation5 + $0x8] sm:$0xf]
    %v59 = vld [vmem:[#allocation5 + $0xc] sm:$0xf]
    %v60 = vld [vmem:[#allocation5 + $0x10] sm:$0xf]
    %v61 = vld [vmem:[#allocation5 + $0x14] sm:$0xf]
    %v62 = vld [vmem:[#allocation5 + $0x18] sm:$0xf]
    %v63 = vld [vmem:[#allocation5 + $0x1c] sm:$0xf]
    %v64 = vld [vmem:[#allocation5 + $0x20] sm:$0xf]
    %v65 = vld [vmem:[#allocation5 + $0x24] sm:$0xf]
    %v66 = vld [vmem:[#allocation5 + $0x28] sm:$0xf]
    %v67 = vld [vmem:[#allocation5 + $0x2c] sm:$0xf]
    %v68 = vld [vmem:[#allocation5 + $0x30] sm:$0xf]
    %v69 = vld [vmem:[#allocation5 + $0x34] sm:$0xf]
    %v70 = vld [vmem:[#allocation5 + $0x38] sm:$0xf]
    %v71 = vld [vmem:[#allocation5 + $0x3c] sm:$0xf]
    %v88 = vunpack.c.l.b16 %v56
    %v89 = vunpack.c.l.b16 %v57
    %v90 = vunpack.c.l.b16 %v58
    %v91 = vunpack.c.l.b16 %v59
    %v92 = vunpack.c.l.b16 %v60
    %v93 = vunpack.c.l.b16 %v61
    %v94 = vunpack.c.l.b16 %v62
    %v95 = vunpack.c.l.b16 %v63
    %v96 = vunpack.c.l.b16 %v64
    %v97 = vunpack.c.l.b16 %v65
    %v98 = vunpack.c.l.b16 %v66
    %v99 = vunpack.c.l.b16 %v67
    %v100 = vunpack.c.l.b16 %v68
    %v101 = vunpack.c.l.b16 %v69
    %v102 = vunpack.c.l.b16 %v70
    %v103 = vunpack.c.l.b16 %v71
    %v104 = vpack.c.b16 %v89, %v88
    %v105 = vpack.c.b16 %v91, %v90
    %v106 = vpack.c.b16 %v93, %v92
    %v107 = vpack.c.b16 %v95, %v94
    %v108 = vpack.c.b16 %v97, %v96
    %v109 = vpack.c.b16 %v99, %v98
    %v110 = vpack.c.b16 %v101, %v100
    %v111 = vpack.c.b16 %v103, %v102
    %120 = vmatprep.subr.bf16.mxu0 0
    %121 = vmatpush1.bf16.msra.mxu0 %v111
    %122 = vmatprep.subr.bf16.mxu0 0
    %123 = vmatpush1.bf16.msra.mxu0 %v110
    %124 = vmatprep.subr.bf16.mxu0 0
    %125 = vmatpush1.bf16.msra.mxu0 %v109
    %126 = vmatprep.subr.bf16.mxu0 0
    %127 = vmatpush1.bf16.msra.mxu0 %v108
    %128 = vmatprep.subr.bf16.mxu0 0
    %129 = vmatpush1.bf16.msra.mxu0 %v107
    %130 = vmatprep.subr.bf16.mxu0 0
    %131 = vmatpush1.bf16.msra.mxu0 %v106
    %132 = vmatprep.subr.bf16.mxu0 0
    %133 = vmatpush1.bf16.msra.mxu0 %v105
    %134 = vmatprep.subr.bf16.mxu0 0
    %135 = vmatpush1.bf16.msra.mxu0 %v104
    %136 = vmatprep.subr.bf16.mxu0 0
    %137 = vmatpush2.bf16.msra.mxu0 0
    %138 = vmatprep.subr.bf16.mxu0 0
    %139 = vmatpush2.bf16.msra.mxu0 0
    %140 = vmatprep.subr.bf16.mxu0 0
    %141 = vmatpush2.bf16.msra.mxu0 0
    %142 = vmatprep.subr.bf16.mxu0 0
    %143 = vmatpush2.bf16.msra.mxu0 0
    %144 = vmatprep.subr.bf16.mxu0 0
    %145 = vmatpush2.bf16.msra.mxu0 0
    %146 = vmatprep.subr.bf16.mxu0 0
    %147 = vmatpush2.bf16.msra.mxu0 0
    %148 = vmatprep.subr.bf16.mxu0 0
    %149 = vmatpush2.bf16.msra.mxu0 0
    %150 = vmatprep.subr.bf16.mxu0 0
    %151 = vmatpush2.bf16.msra.mxu0 0
    %152 = vmatprep.mubr.bf16.mxu0 0
    %153 = vmatmul.mubr.bf16.gmra.mxu0 %v55
    %v154 = vpop.f32.mrf.mxu0
    %v155 = vadd.f32 0.0, %v154
    %v156 = vpop.f32.mrf.mxu0
    %v157 = vpop.f32.mrf.mxu0
    %v158 = vpop.f32.mrf.mxu0
    %159 = vdwg.mxu0
    %v160 = vadd.f32 %v54, %v155
    %161 = vst [vmem:[#allocation7] sm:$0xff] %v160
    // Predicated region
    $region26: #{tpu_custom_call.1} parent=1 // pred_check
      _
    $region27: #{tpu_custom_call.1} parent=1 // pred_check_branch
      %163 = sbr.rel (0) target = $region29
    $region28: #{tpu_custom_call.1} parent=1 // pred_region
      %s165 = ssub.s32 128, 128
      %166 = vsyncadd [#allocation4], %s165
      %s168 = sshll.u32 [#allocation7], 4
      %s169 = int_to_ptr.vmem [resolvable:$true] %s168
      %171 = dma.vmem_to_hbm [thread:$0]  %s169, 128, %s3, [#allocation4]
    $region29: #{tpu_custom_call.1} parent=1 // pred_fallthru
      _
    // Predicated region
    $region30: #{tpu_custom_call.1} parent=1 // pred_check
      _
    $region31: #{tpu_custom_call.1} parent=1 // pred_check_branch
      %173 = sbr.rel (0) target = $region33
    $region32: #{tpu_custom_call.1} parent=1 // pred_region
      %174 = dma.done [#allocation4], 128
    $region33: #{tpu_custom_call.1} parent=1 // pred_fallthru
      _
    %175 = vsyncpa [#allocation3], 1
    %176 = vsyncpa [#allocation6], 1
    %177 = vsyncpa [#allocation4], 1

</llo_original>
